<compile_context>
chip_gen: v5e
topology: v5e:2x2
jax: 0.10.0
libtpu: 0.0.40
codegen_flags: <defaults>
</compile_context>

<pallas_src>
import math
import functools

import jax
import jax.numpy as jnp
from jax.experimental import pallas as pl
from jax.experimental.pallas import tpu as pltpu


def _mha_kernel(x_ref, wqkv_ref, bqkv_ref, wo_ref, bo_ref, o_ref, *, num_heads):
    """Multi-head self-attention for ONE batch element (batch axis = grid)."""
    S, E = x_ref.shape
    H = num_heads
    Dh = E // H

    # ---- fused input projection: (S, E) @ (E, 3E) MXU matmul ----
    # 1/sqrt(Dh) is already folded into the Wq / bq columns host-side.
    x = x_ref[...]
    qkv = jnp.dot(x, wqkv_ref[...],
                  preferred_element_type=jnp.float32) + bqkv_ref[...]   # (S, 3E)

    # Static contiguous lane slices (zero-cost views), then one reshape each to
    # (S, H, Dh).  The batched einsums put heads on the batch (major) axis.
    q = qkv[:, 0 * E:1 * E].reshape(S, H, Dh)
    k = qkv[:, 1 * E:2 * E].reshape(S, H, Dh)
    v = qkv[:, 2 * E:3 * E].reshape(S, H, Dh)

    # scores: (H, S, S), softmax over keys
    s = jnp.einsum("qhd,khd->hqk", q, k, preferred_element_type=jnp.float32)
    s = s - jnp.max(s, axis=-1, keepdims=True)
    p = jnp.exp(s)
    p = p * pl.reciprocal(jnp.sum(p, axis=-1, keepdims=True), approx=True)

    # Weighted sum lands directly in (token, head, dh) order, so the PyTorch
    # head-concat layout is just a reshape — no extra transpose / concatenate.
    attn = jnp.einsum("hqk,khd->qhd", p.astype(v.dtype), v,
                      preferred_element_type=jnp.float32).reshape(S, E)

    # ---- output projection (weight pre-transposed on host) ----
    y = jnp.dot(attn.astype(wo_ref.dtype), wo_ref[...],
                preferred_element_type=jnp.float32) + bo_ref[...]
    o_ref[...] = y.astype(o_ref.dtype)


def prepare_mha_params(params, num_heads, compute_dtype=jnp.float32):
    """One-time host-side weight prep (call once at init, NOT per forward):
    fuse q/k/v into a single pre-transposed (E, 3E) weight, fold the 1/sqrt(Dh)
    attention scale into the q columns, pre-transpose Wo.  compute_dtype=bf16
    enables bf16 MXU inputs on v6e/v7x (accumulation stays f32)."""
    E = params["wq"].shape[0]
    Dh = E // num_heads
    scale = 1.0 / math.sqrt(Dh)
    w_qkv = jnp.concatenate(
        [params["wq"] * scale, params["wk"], params["wv"]], axis=0).T      # (E, 3E)
    b_qkv = jnp.concatenate(
        [params["bq"] * scale, params["bk"], params["bv"]]).reshape(1, 3 * E)
    return {
        "w_qkv": jnp.asarray(w_qkv, compute_dtype),
        "b_qkv": jnp.asarray(b_qkv, jnp.float32),     # added to f32 accumulator
        "wo_t": jnp.asarray(params["wo"].T, compute_dtype),
        "bo": jnp.asarray(params["bo"].reshape(1, E), jnp.float32),
    }


def agri_pattern_attention(x, prepared, num_heads):
    """x: (B, S, E).  prepared: output of prepare_mha_params()."""
    B, S, E = x.shape
    assert E % num_heads == 0, "embed_dim must be divisible by num_heads"
    H, Dh = num_heads, E // num_heads
    w_qkv, b_qkv = prepared["w_qkv"], prepared["b_qkv"]
    wo_t, bo = prepared["wo_t"], prepared["bo"]
    x_in = x.astype(w_qkv.dtype)

    flops = (2 * B * S * E * 3 * E              # fused qkv projection
             + 4 * B * H * S * S * Dh           # scores + weighted sum
             + 2 * B * S * E * E)               # output projection
    transcendentals = B * H * S * S             # softmax exp
    bytes_accessed = (x_in.size * x_in.dtype.itemsize
                      + w_qkv.size * w_qkv.dtype.itemsize
                      + b_qkv.size * 4 + wo_t.size * wo_t.dtype.itemsize
                      + bo.size * 4 + B * S * E * x.dtype.itemsize)

    kernel = functools.partial(_mha_kernel, num_heads=num_heads)
    grid_spec = pltpu.PrefetchScalarGridSpec(
        num_scalar_prefetch=0,
        grid=(B,),                                              # parallel over batch
        in_specs=[
            pl.BlockSpec((None, S, E), lambda b: (b, 0, 0)),    # x[b]   (squeezed)
            pl.BlockSpec((E, 3 * E), lambda b: (0, 0)),         # weights resident
            pl.BlockSpec((1, 3 * E), lambda b: (0, 0)),
            pl.BlockSpec((E, E), lambda b: (0, 0)),
            pl.BlockSpec((1, E), lambda b: (0, 0)),
        ],
        out_specs=pl.BlockSpec((None, S, E), lambda b: (b, 0, 0)),
    )
    return pl.pallas_call(
        kernel,
        out_shape=jax.ShapeDtypeStruct((B, S, E), x.dtype),
        grid_spec=grid_spec,
        compiler_params=pltpu.CompilerParams(
            dimension_semantics=("parallel",)),                 # v7x: 2 TCs share B
        cost_estimate=pl.CostEstimate(flops=flops,
                                      transcendentals=transcendentals,
                                      bytes_accessed=bytes_accessed),
    )(x_in, w_qkv, b_qkv, wo_t, bo)


def _reference(x, params, num_heads):
    """Pure-JAX reference of nn.MultiheadAttention forward (inference)."""
    B, S, E = x.shape
    Dh = E // num_heads
    q = x @ params["wq"].T + params["bq"]
    k = x @ params["wk"].T + params["bk"]
    v = x @ params["wv"].T + params["bv"]

    def split(t):  # (B, S, E) -> (B, H, S, Dh)
        return t.reshape(B, S, num_heads, Dh).transpose(0, 2, 1, 3)

    qh, kh, vh = split(q), split(k), split(v)
    s = jnp.einsum("bhqd,bhkd->bhqk", qh, kh) / math.sqrt(Dh)
    p = jax.nn.softmax(s, axis=-1)
    o = jnp.einsum("bhqk,bhkd->bhqd", p, vh)
    o = o.transpose(0, 2, 1, 3).reshape(B, S, E)
    return o @ params["wo"].T + params["bo"]


def init_params(key, embed_dim):
    """Deterministic synthetic weights matching nn.MultiheadAttention shapes:
    in_proj_weight (3E, E), in_proj_bias (3E,), out_proj (E, E) + (E,)."""
    ks = jax.random.split(key, 4)
    bound = 1.0 / math.sqrt(embed_dim)
    in_proj_w = jax.random.uniform(ks[0], (3 * embed_dim, embed_dim),
                                   minval=-bound, maxval=bound, dtype=jnp.float32)
    in_proj_b = jax.random.uniform(ks[1], (3 * embed_dim,),
                                   minval=-bound, maxval=bound, dtype=jnp.float32)
    out_w = jax.random.uniform(ks[2], (embed_dim, embed_dim),
                               minval=-bound, maxval=bound, dtype=jnp.float32)
    out_b = jax.random.uniform(ks[3], (embed_dim,),
                               minval=-bound, maxval=bound, dtype=jnp.float32)
    E = embed_dim
    return {
        "wq": in_proj_w[:E], "wk": in_proj_w[E:2 * E], "wv": in_proj_w[2 * E:],
        "bq": in_proj_b[:E], "bk": in_proj_b[E:2 * E], "bv": in_proj_b[2 * E:],
        "wo": out_w, "bo": out_b,
    }


if __name__ == "__main__":
    B, S, E, H = 2, 8, 32, 4   # small shapes consistent with the module
    key = jax.random.PRNGKey(0)
    kx, kp = jax.random.split(key)
    x = jax.random.normal(kx, (B, S, E), dtype=jnp.float32)
    params = init_params(kp, E)

    # One-time weight fusion / scale-folding (kept off the per-call path).
    prepared = prepare_mha_params(params, num_heads=H)   # compute_dtype=f32 here

    out = jax.block_until_ready(agri_pattern_attention(x, prepared, num_heads=H))
    ref = _reference(x, params, num_heads=H)

    assert out.shape == (B, S, E)
    # tolerance leaves margin for the EUP approx-reciprocal softmax normalization
    assert jnp.allclose(out, ref, atol=2e-3, rtol=2e-3), "mismatch vs reference"

    print("KERNEL_OK")
</pallas_src>

<mosaic_0001>
module attributes {stable_mosaic.version = 11 : i64} {
  func.func @_mha_kernel(%arg0: i32, %arg1: memref<1x8x32xf32, #tpu.memory_space<vmem>>, %arg2: memref<32x96xf32, #tpu.memory_space<vmem>>, %arg3: memref<1x96xf32, #tpu.memory_space<vmem>>, %arg4: memref<32x32xf32, #tpu.memory_space<vmem>>, %arg5: memref<1x32xf32, #tpu.memory_space<vmem>>, %arg6: memref<1x8x32xf32, #tpu.memory_space<vmem>>) attributes {dimension_semantics = [#tpu.dimension_semantics<parallel>], iteration_bounds = array<i64: 2>, scalar_prefetch = 0 : i64, scratch_operands = 0 : i64, tpu.core_type = #tpu.core_type<tc>, window_params = [{transform_indices = @transform_0, window_bounds = array<i64: 1, 8, 32>}, {pipeline_mode = #tpu.pipeline_mode<synchronous>, transform_indices = @transform_1, window_bounds = array<i64: 32, 96>}, {pipeline_mode = #tpu.pipeline_mode<synchronous>, transform_indices = @transform_2, window_bounds = array<i64: 1, 96>}, {pipeline_mode = #tpu.pipeline_mode<synchronous>, transform_indices = @transform_3, window_bounds = array<i64: 32, 32>}, {pipeline_mode = #tpu.pipeline_mode<synchronous>, transform_indices = @transform_4, window_bounds = array<i64: 1, 32>}, {transform_indices = @transform_5, window_bounds = array<i64: 1, 8, 32>}]} {
    %c0 = arith.constant 0 : index
    %c0_0 = arith.constant 0 : index
    %c0_1 = arith.constant 0 : index
    %0 = vector.load %arg1[%c0, %c0_0, %c0_1] : memref<1x8x32xf32, #tpu.memory_space<vmem>>, vector<1x8x32xf32>
    %1 = vector.shape_cast %0 : vector<1x8x32xf32> to vector<8x32xf32>
    %c0_2 = arith.constant 0 : index
    %c0_3 = arith.constant 0 : index
    %2 = vector.load %arg2[%c0_2, %c0_3] : memref<32x96xf32, #tpu.memory_space<vmem>>, vector<32x96xf32>
    %cst = arith.constant dense<0.000000e+00> : vector<8x96xf32>
    %3 = tpu.matmul %1, %2, %cst {dimension_numbers = #tpu.dot_dimension_numbers<[1], [0], [0], [1], [0, 0, 1, 1], [], []>} : vector<8x32xf32>, vector<32x96xf32>, vector<8x96xf32> -> vector<8x96xf32>
    %c0_4 = arith.constant 0 : index
    %c0_5 = arith.constant 0 : index
    %4 = vector.load %arg3[%c0_4, %c0_5] : memref<1x96xf32, #tpu.memory_space<vmem>>, vector<1x96xf32>
    %5 = vector.broadcast %4 : vector<1x96xf32> to vector<8x96xf32>
    %6 = arith.addf %3, %5 : vector<8x96xf32>
    %7 = vector.extract_strided_slice %6 {offsets = [0, 0], sizes = [8, 32], strides = [1, 1]} : vector<8x96xf32> to vector<8x32xf32>
    %8 = vector.shape_cast %7 : vector<8x32xf32> to vector<8x4x8xf32>
    %9 = vector.extract_strided_slice %6 {offsets = [0, 32], sizes = [8, 32], strides = [1, 1]} : vector<8x96xf32> to vector<8x32xf32>
    %10 = vector.shape_cast %9 : vector<8x32xf32> to vector<8x4x8xf32>
    %11 = vector.extract_strided_slice %6 {offsets = [0, 64], sizes = [8, 32], strides = [1, 1]} : vector<8x96xf32> to vector<8x32xf32>
    %12 = vector.shape_cast %11 : vector<8x32xf32> to vector<8x4x8xf32>
    "tpu.trace_start"() <{level = 10 : i32, message = "qhd,khd->hqk"}> : () -> ()
    %cst_6 = arith.constant dense<0.000000e+00> : vector<4x8x8xf32>
    %13 = tpu.matmul %8, %10, %cst_6 {dimension_numbers = #tpu.dot_dimension_numbers<[2], [2], [0], [0], [0, 1, 0, 0, 1, 0], [1], [1]>} : vector<8x4x8xf32>, vector<8x4x8xf32>, vector<4x8x8xf32> -> vector<4x8x8xf32>
    "tpu.trace_stop"() : () -> ()
    %cst_7 = arith.constant dense<0xFF800000> : vector<4x8xf32>
    %14 = vector.multi_reduction <maximumf>, %13, %cst_7 [2] : vector<4x8x8xf32> to vector<4x8xf32>
    %15 = vector.shape_cast %14 : vector<4x8xf32> to vector<4x8x1xf32>
    %16 = vector.broadcast %15 : vector<4x8x1xf32> to vector<4x8x8xf32>
    %17 = arith.subf %13, %16 : vector<4x8x8xf32>
    %18 = math.exp %17 : vector<4x8x8xf32>
    %cst_8 = arith.constant dense<0.000000e+00> : vector<4x8xf32>
    %19 = vector.multi_reduction <add>, %18, %cst_8 [2] : vector<4x8x8xf32> to vector<4x8xf32>
    %20 = vector.shape_cast %19 : vector<4x8xf32> to vector<4x8x1xf32>
    %21 = tpu.reciprocal %20 {approx = true} : vector<4x8x1xf32> -> vector<4x8x1xf32>
    %22 = vector.broadcast %21 : vector<4x8x1xf32> to vector<4x8x8xf32>
    %23 = arith.mulf %18, %22 : vector<4x8x8xf32>
    "tpu.trace_start"() <{level = 10 : i32, message = "hqk,khd->qhd"}> : () -> ()
    %cst_9 = arith.constant dense<0.000000e+00> : vector<4x8x8xf32>
    %24 = tpu.matmul %12, %23, %cst_9 {dimension_numbers = #tpu.dot_dimension_numbers<[0], [2], [2], [1], [0, 1, 0, 2, 1, 1], [1], [0]>} : vector<8x4x8xf32>, vector<4x8x8xf32>, vector<4x8x8xf32> -> vector<4x8x8xf32>
    %25 = tpu.transpose %24, [2, 0, 1] : vector<4x8x8xf32> -> vector<8x4x8xf32>
    "tpu.trace_stop"() : () -> ()
    %26 = vector.shape_cast %25 : vector<8x4x8xf32> to vector<8x32xf32>
    %c0_10 = arith.constant 0 : index
    %c0_11 = arith.constant 0 : index
    %27 = vector.load %arg4[%c0_10, %c0_11] : memref<32x32xf32, #tpu.memory_space<vmem>>, vector<32x32xf32>
    %cst_12 = arith.constant dense<0.000000e+00> : vector<8x32xf32>
    %28 = tpu.matmul %26, %27, %cst_12 {dimension_numbers = #tpu.dot_dimension_numbers<[1], [0], [0], [1], [0, 0, 1, 1], [], []>} : vector<8x32xf32>, vector<32x32xf32>, vector<8x32xf32> -> vector<8x32xf32>
    %c0_13 = arith.constant 0 : index
    %c0_14 = arith.constant 0 : index
    %29 = vector.load %arg5[%c0_13, %c0_14] : memref<1x32xf32, #tpu.memory_space<vmem>>, vector<1x32xf32>
    %30 = vector.broadcast %29 : vector<1x32xf32> to vector<8x32xf32>
    %31 = arith.addf %28, %30 : vector<8x32xf32>
    %c0_15 = arith.constant 0 : index
    %c0_16 = arith.constant 0 : index
    %c0_17 = arith.constant 0 : index
    %32 = vector.load %arg6[%c0_15, %c0_16, %c0_17] : memref<1x8x32xf32, #tpu.memory_space<vmem>>, vector<1x8x32xf32>
    %33 = vector.shape_cast %32 : vector<1x8x32xf32> to vector<8x32xf32>
    %34 = vector.shape_cast %31 : vector<8x32xf32> to vector<1x8x32xf32>
    tpu.vector_store %arg6[%c0_15, %c0_16, %c0_17], %34 {strides = array<i32>} : memref<1x8x32xf32, #tpu.memory_space<vmem>>, vector<1x8x32xf32>,
    return
  }
  func.func @transform_0(%arg0: i32) -> (i32, i32, i32) {
    %c0_i32 = arith.constant 0 : i32
    %c0_i32_0 = arith.constant 0 : i32
    %c0_i32_1 = arith.constant 0 : i32
    return %arg0, %c0_i32, %c0_i32_0 : i32, i32, i32
  }
  func.func @transform_1(%arg0: i32) -> (i32, i32) {
    %c0_i32 = arith.constant 0 : i32
    %c0_i32_0 = arith.constant 0 : i32
    %c0_i32_1 = arith.constant 0 : i32
    return %c0_i32, %c0_i32_0 : i32, i32
  }
  func.func @transform_2(%arg0: i32) -> (i32, i32) {
    %c0_i32 = arith.constant 0 : i32
    %c0_i32_0 = arith.constant 0 : i32
    %c0_i32_1 = arith.constant 0 : i32
    return %c0_i32, %c0_i32_0 : i32, i32
  }
  func.func @transform_3(%arg0: i32) -> (i32, i32) {
    %c0_i32 = arith.constant 0 : i32
    %c0_i32_0 = arith.constant 0 : i32
    %c0_i32_1 = arith.constant 0 : i32
    return %c0_i32, %c0_i32_0 : i32, i32
  }
  func.func @transform_4(%arg0: i32) -> (i32, i32) {
    %c0_i32 = arith.constant 0 : i32
    %c0_i32_0 = arith.constant 0 : i32
    %c0_i32_1 = arith.constant 0 : i32
    return %c0_i32, %c0_i32_0 : i32, i32
  }
  func.func @transform_5(%arg0: i32) -> (i32, i32, i32) {
    %c0_i32 = arith.constant 0 : i32
    %c0_i32_0 = arith.constant 0 : i32
    %c0_i32_1 = arith.constant 0 : i32
    return %arg0, %c0_i32, %c0_i32_0 : i32, i32, i32
  }
}

</mosaic_0001>

<llo_original>
// kernel: tpu_custom_call.1
$region0: #{tpu_custom_call.1}
  #allocation0 [shape = 'u32[]', space=smem, size = 0x4, offset = 0x4, fixed_abs, tag = 'smem constant byte address 0x4 - core index']
  #allocation1 [shape = 'u32[72,128]{1,0:T(1,128)}', space=vmem, size = 0x9000, scoped, tag = 'internal scratch']
  %s0 = inlined_call_operand.hbm [shape: f32[2,8,32], index: 0, kind: input, shape index: {}]
  %s1 = inlined_call_operand.hbm [shape: f32[32,96], index: 1, kind: input, shape index: {}]
  %s2 = inlined_call_operand.vmem [shape: f32[1,96], index: 2, kind: input, shape index: {}]
  %s3 = inlined_call_operand.hbm [shape: f32[32,32], index: 3, kind: input, shape index: {}]
  %s4 = inlined_call_operand.vmem [shape: f32[1,32], index: 4, kind: input, shape index: {}]
  %s5 = inlined_call_operand.hbm [shape: f32[2,8,32], index: 5, kind: output, shape index: {}]
  %s6 = sld [smem:[#allocation0]]
  $region65: #{tpu_custom_call.1} parent=0
    _
  %s8 = ssub.s32 1, %s6
  %s9 = scalar_select 0, %s8, %s6
  $region1: #{tpu_custom_call.1} parent=0
    #allocation2 [shape = 'u8[8192]{0}', space=vmem, size = 0x2000, scoped, tag = 'input window, operand 0']
    #allocation3 [shape = 's32[2]{0}', space=sflag, size = 0x8, scoped, tag = 'scoped memory for tpu_custom_call.1']
    #allocation4 [shape = 's32[2]{0}', space=sflag, size = 0x8, scoped, tag = 'scoped memory for tpu_custom_call.1']
    #allocation5 [shape = 'u8[16384]{0}', space=vmem, size = 0x4000, scoped, tag = 'input window, operand 1, single buffered']
    #allocation6 [shape = 's32[1]{0}', space=sflag, size = 0x4, scoped, tag = 'scoped memory for tpu_custom_call.1']
    #allocation7 [shape = 'u8[16384]{0}', space=vmem, size = 0x4000, scoped, tag = 'input window, operand 3, single buffered']
    #allocation8 [shape = 'u8[8192]{0}', space=vmem, size = 0x2000, scoped, tag = 'output window, operand 0']
    %10 = vsyncpa [#allocation3], 0
    %s11 = scalar_lea.sflag [#allocation3], 1
    %12 = vsyncpa %s11, 0
    %13 = vsyncpa [#allocation6], 0
    %14 = vsyncpa [#allocation4], 0
    %s15 = scalar_lea.sflag [#allocation4], 1
    %16 = vsyncpa %s15, 0
    loop: start=0, step=1, limit=4
    $region2: #{tpu_custom_call.1} parent=1 // loop_pre_header
      _
    $region3: #{tpu_custom_call.1} parent=1 // loop_header
      %s18 = sphi 0, %s22
      %p19 = scmp.ge.s32.totalorder %s18, 4
      %s28 = sphi 0, %s30
      %s31 = sphi 0, %s28
      %s32 = sphi 0, %s31
      %s48 = sphi 0, %s32
      %s52 = sphi 0, %s52
      %s54 = sphi 0, %s52
      %s55 = sphi 0, %s54
      %s69 = sphi 0, %s55
      %s73 = sphi 0, %s73
      %s75 = sphi 0, %s73
      %s76 = sphi 0, %s75
      %s90 = sphi 0, %s76
      %s94 = sphi 0, %s94
      %s96 = sphi 0, %s94
      %s97 = sphi 0, %s96
      %s111 = sphi 0, %s97
      %s115 = sphi 0, %s115
      %s117 = sphi 0, %s115
      %s118 = sphi 0, %s117
      %s132 = sphi 0, %s118
      %s138 = sphi 0, %s140
      %s141 = sphi 0, %s138
      %s142 = sphi 0, %s141
      %s158 = sphi 0, %s142
    $region4: #{tpu_custom_call.1} parent=1 // loop_header_branch
      %21 = sbr.rel (%p19) target = $region8
    $region5: #{tpu_custom_call.1} parent=1 // loop_body
      %s23 = ssub.s32 %s18, 1
      %s24 = ssub.s32 %s18, 2
      %s25 = sadd.s32 %s18, 1
      %s26 = ssub.s32 %s18, %s25
      %p27 = scmp.eq.s32.totalorder %s26, 0
      %s29 = sadd.s32 %s28, 1
      %s30 = scalar_select %p27, %s28, %s29
      %p33 = pneg %p27
      %p34 = scmp.eq.s32.totalorder %s18, 1
      %p35 = por %p33, %p34
      %p36 = scmp.ne.s32.totalorder %s28, %s31
      %p37 = scmp.eq.s32.totalorder %s18, 0
      %p38 = por %p36, %p37
      %p39 = scmp.ne.s32.totalorder %s28, %s31
      %p40 = scmp.eq.s32.totalorder %s23, 1
      %p41 = por %p39, %p40
      %p42 = scmp.ne.s32.totalorder %s31, %s32
      %p43 = scmp.eq.s32.totalorder %s23, 0
      %p44 = por %p42, %p43
      %p45 = scmp.ne.s32.totalorder %s31, %s32
      %p46 = scmp.eq.s32.totalorder %s24, 1
      %p47 = por %p45, %p46
      %p49 = scmp.ne.s32.totalorder %s32, %s48
      %p50 = scmp.eq.s32.totalorder %s24, 0
      %p51 = por %p49, %p50
      %s53 = sadd.s32 %s52, 1
      %p56 = scmp.eq.s32.totalorder %s18, 1
      %p57 = scmp.ne.s32.totalorder %s52, %s54
      %p58 = scmp.eq.s32.totalorder %s18, 0
      %p59 = por %p57, %p58
      %p60 = scmp.ne.s32.totalorder %s52, %s54
      %p61 = scmp.eq.s32.totalorder %s23, 1
      %p62 = por %p60, %p61
      %p63 = scmp.ne.s32.totalorder %s54, %s55
      %p64 = scmp.eq.s32.totalorder %s23, 0
      %p65 = por %p63, %p64
      %p66 = scmp.ne.s32.totalorder %s54, %s55
      %p67 = scmp.eq.s32.totalorder %s24, 1
      %p68 = por %p66, %p67
      %p70 = scmp.ne.s32.totalorder %s55, %s69
      %p71 = scmp.eq.s32.totalorder %s24, 0
      %p72 = por %p70, %p71
      %s74 = sadd.s32 %s73, 1
      %p77 = scmp.eq.s32.totalorder %s18, 1
      %p78 = scmp.ne.s32.totalorder %s73, %s75
      %p79 = scmp.eq.s32.totalorder %s18, 0
      %p80 = por %p78, %p79
      %p81 = scmp.ne.s32.totalorder %s73, %s75
      %p82 = scmp.eq.s32.totalorder %s23, 1
      %p83 = por %p81, %p82
      %p84 = scmp.ne.s32.totalorder %s75, %s76
      %p85 = scmp.eq.s32.totalorder %s23, 0
      %p86 = por %p84, %p85
      %p87 = scmp.ne.s32.totalorder %s75, %s76
      %p88 = scmp.eq.s32.totalorder %s24, 1
      %p89 = por %p87, %p88
      %p91 = scmp.ne.s32.totalorder %s76, %s90
      %p92 = scmp.eq.s32.totalorder %s24, 0
      %p93 = por %p91, %p92
      %s95 = sadd.s32 %s94, 1
      %p98 = scmp.eq.s32.totalorder %s18, 1
      %p99 = scmp.ne.s32.totalorder %s94, %s96
      %p100 = scmp.eq.s32.totalorder %s18, 0
      %p101 = por %p99, %p100
      %p102 = scmp.ne.s32.totalorder %s94, %s96
      %p103 = scmp.eq.s32.totalorder %s23, 1
      %p104 = por %p102, %p103
      %p105 = scmp.ne.s32.totalorder %s96, %s97
      %p106 = scmp.eq.s32.totalorder %s23, 0
      %p107 = por %p105, %p106
      %p108 = scmp.ne.s32.totalorder %s96, %s97
      %p109 = scmp.eq.s32.totalorder %s24, 1
      %p110 = por %p108, %p109
      %p112 = scmp.ne.s32.totalorder %s97, %s111
      %p113 = scmp.eq.s32.totalorder %s24, 0
      %p114 = por %p112, %p113
      %s116 = sadd.s32 %s115, 1
      %p119 = scmp.eq.s32.totalorder %s18, 1
      %p120 = scmp.ne.s32.totalorder %s115, %s117
      %p121 = scmp.eq.s32.totalorder %s18, 0
      %p122 = por %p120, %p121
      %p123 = scmp.ne.s32.totalorder %s115, %s117
      %p124 = scmp.eq.s32.totalorder %s23, 1
      %p125 = por %p123, %p124
      %p126 = scmp.ne.s32.totalorder %s117, %s118
      %p127 = scmp.eq.s32.totalorder %s23, 0
      %p128 = por %p126, %p127
      %p129 = scmp.ne.s32.totalorder %s117, %s118
      %p130 = scmp.eq.s32.totalorder %s24, 1
      %p131 = por %p129, %p130
      %p133 = scmp.ne.s32.totalorder %s118, %s132
      %p134 = scmp.eq.s32.totalorder %s24, 0
      %p135 = por %p133, %p134
      %s136 = ssub.s32 %s18, %s25
      %p137 = scmp.eq.s32.totalorder %s136, 0
      %s139 = sadd.s32 %s138, 1
      %s140 = scalar_select %p137, %s138, %s139
      %p143 = pneg %p137
      %p144 = scmp.eq.s32.totalorder %s18, 1
      %p145 = por %p143, %p144
      %p146 = scmp.ne.s32.totalorder %s138, %s141
      %p147 = scmp.eq.s32.totalorder %s18, 0
      %p148 = por %p146, %p147
      %p149 = scmp.ne.s32.totalorder %s138, %s141
      %p150 = scmp.eq.s32.totalorder %s23, 1
      %p151 = por %p149, %p150
      %p152 = scmp.ne.s32.totalorder %s141, %s142
      %p153 = scmp.eq.s32.totalorder %s23, 0
      %p154 = por %p152, %p153
      %p155 = scmp.ne.s32.totalorder %s141, %s142
      %p156 = scmp.eq.s32.totalorder %s24, 1
      %p157 = por %p155, %p156
      %p159 = scmp.ne.s32.totalorder %s142, %s158
      %p160 = scmp.eq.s32.totalorder %s24, 0
      %p161 = por %p159, %p160
      %p162 = scmp.le.s32.totalorder 1, %s18
      %p163 = scmp.lt.s32.totalorder %s18, 3
      %p164 = pnand %p162, %p163
      %p165 = pneg %p164
      // Predicated region
      $region9: #{tpu_custom_call.1} parent=5 // pred_check
        _
      $region10: #{tpu_custom_call.1} parent=5 // pred_check_branch
        %167 = sbr.rel (%p164) target = $region12
      $region11: #{tpu_custom_call.1} parent=5 // pred_region
        %s168 = ssub.s32 %s18, 1
        // Predicated region
        $region13: #{tpu_custom_call.1} parent=11 // pred_check
          %p169 = pneg %p65
        $region14: #{tpu_custom_call.1} parent=11 // pred_check_branch
          %171 = sbr.rel (%p169) target = $region16
        $region15: #{tpu_custom_call.1} parent=11 // pred_region
          %173 = vsyncadd [#allocation6], 0
          %s174 = sshll.u32 %s1, 4
          %s175 = int_to_ptr.hbm [resolvable:$true] %s174
          %s176 = sshll.u32 [#allocation5], 4
          %s177 = int_to_ptr.vmem [resolvable:$true] %s176
          %182 = dma.hbm_to_vmem [thread:$0]  %s175, 512, %s177, [#allocation6], 128, 128, 8
        $region16: #{tpu_custom_call.1} parent=11 // pred_fallthru
          _
        // Predicated region
        $region17: #{tpu_custom_call.1} parent=11 // pred_check
          %p183 = pneg %p86
        $region18: #{tpu_custom_call.1} parent=11 // pred_check_branch
          %185 = sbr.rel (%p183) target = $region20
        $region19: #{tpu_custom_call.1} parent=11 // pred_region
          _
        $region20: #{tpu_custom_call.1} parent=11 // pred_fallthru
          _
        // Predicated region
        $region21: #{tpu_custom_call.1} parent=11 // pred_check
          %p186 = pneg %p107
        $region22: #{tpu_custom_call.1} parent=11 // pred_check_branch
          %188 = sbr.rel (%p186) target = $region24
        $region23: #{tpu_custom_call.1} parent=11 // pred_region
          %190 = vsyncadd [#allocation6], 0
          %s191 = sshll.u32 %s3, 4
          %s192 = int_to_ptr.hbm [resolvable:$true] %s191
          %s193 = sshll.u32 [#allocation7], 4
          %s194 = int_to_ptr.vmem [resolvable:$true] %s193
          %199 = dma.hbm_to_vmem [thread:$0]  %s192, 512, %s194, [#allocation6], 128, 128, 8
        $region24: #{tpu_custom_call.1} parent=11 // pred_fallthru
          _
        // Predicated region
        $region25: #{tpu_custom_call.1} parent=11 // pred_check
          %p200 = pneg %p128
        $region26: #{tpu_custom_call.1} parent=11 // pred_check_branch
          %202 = sbr.rel (%p200) target = $region28
        $region27: #{tpu_custom_call.1} parent=11 // pred_region
          _
        $region28: #{tpu_custom_call.1} parent=11 // pred_fallthru
          _
      $region12: #{tpu_custom_call.1} parent=5 // pred_fallthru
        _
      %p203 = scmp.lt.s32.totalorder %s18, 2
      // Predicated region
      $region29: #{tpu_custom_call.1} parent=5 // pred_check
        %p204 = pneg %p203
      $region30: #{tpu_custom_call.1} parent=5 // pred_check_branch
        %206 = sbr.rel (%p204) target = $region32
      $region31: #{tpu_custom_call.1} parent=5 // pred_region
        // Predicated region
        $region33: #{tpu_custom_call.1} parent=31 // pred_check
          %p207 = pneg %p38
        $region34: #{tpu_custom_call.1} parent=31 // pred_check_branch
          %209 = sbr.rel (%p207) target = $region36
        $region35: #{tpu_custom_call.1} parent=31 // pred_region
          %s210 = sand.u32 %s28, 1
          %s211 = scalar_lea.sflag [#allocation3], %s210
          %s212 = sand.u32 %s28, 1
          %s213 = smul.addr %s212, 8
          %s214 = scalar_lea.vmem [#allocation2], %s213
          %216 = vsyncadd %s211, 0
          %s217 = smul.addr %s18, 8
          %s218 = scalar_lea.hbm %s0, %s217
          %s220 = sshll.u32 %s218, 4
          %s221 = int_to_ptr.hbm [resolvable:$true] %s220
          %s222 = sshll.u32 %s214, 4
          %s223 = int_to_ptr.vmem [resolvable:$true] %s222
          %225 = dma.hbm_to_vmem [thread:$0]  %s221, 128, %s223, %s211
        $region36: #{tpu_custom_call.1} parent=31 // pred_fallthru
          _
      $region32: #{tpu_custom_call.1} parent=5 // pred_fallthru
        _
      %p226 = scmp.le.s32.totalorder 1, %s18
      %p227 = scmp.lt.s32.totalorder %s18, 3
      %p228 = pnand %p226, %p227
      %p229 = pneg %p228
      // Predicated region
      $region37: #{tpu_custom_call.1} parent=5 // pred_check
        _
      $region38: #{tpu_custom_call.1} parent=5 // pred_check_branch
        %231 = sbr.rel (%p228) target = $region40
      $region39: #{tpu_custom_call.1} parent=5 // pred_region
        %s232 = ssub.s32 %s18, 1
        %s233 = sand.u32 %s31, 1
        %s234 = scalar_lea.sflag [#allocation3], %s233
        %s235 = sand.u32 %s31, 1
        %s236 = smul.addr %s235, 8
        %s237 = scalar_lea.vmem [#allocation2], %s236
        // Predicated region
        $region41: #{tpu_custom_call.1} parent=39 // pred_check
          %p238 = pneg %p44
        $region42: #{tpu_custom_call.1} parent=39 // pred_check_branch
          %240 = sbr.rel (%p238) target = $region44
        $region43: #{tpu_custom_call.1} parent=39 // pred_region
          %242 = dma.done %s234, 128
        $region44: #{tpu_custom_call.1} parent=39 // pred_fallthru
          _
        // Predicated region
        $region45: #{tpu_custom_call.1} parent=39 // pred_check
          %p243 = pneg %p65
        $region46: #{tpu_custom_call.1} parent=39 // pred_check_branch
          %245 = sbr.rel (%p243) target = $region48
        $region47: #{tpu_custom_call.1} parent=39 // pred_region
          %247 = dma.done [#allocation6], 512
        $region48: #{tpu_custom_call.1} parent=39 // pred_fallthru
          _
        // Predicated region
        $region49: #{tpu_custom_call.1} parent=39 // pred_check
          %p248 = pneg %p107
        $region50: #{tpu_custom_call.1} parent=39 // pred_check_branch
          %250 = sbr.rel (%p248) target = $region52
        $region51: #{tpu_custom_call.1} parent=39 // pred_region
          %252 = dma.done [#allocation6], 512
        $region52: #{tpu_custom_call.1} parent=39 // pred_fallthru
          _
        %s253 = sand.u32 %s31, 1
        %s254 = scalar_lea.sflag [#allocation3], %s253
        %s255 = sand.u32 %s31, 1
        %s256 = smul.addr %s255, 8
        %s257 = scalar_lea.vmem [#allocation2], %s256
        %p258 = pneg %p44
        %p259 = pneg %p41
        %p260 = pneg %p65
        %p261 = pneg %p62
        %p262 = pneg %p86
        %p263 = pneg %p83
        %p264 = pneg %p107
        %p265 = pneg %p104
        %p266 = pneg %p128
        %p267 = pneg %p125
        %p268 = pneg %p154
        %p269 = pneg %p151
        %s270 = sand.u32 %s141, 1
        %s271 = scalar_lea.sflag [#allocation4], %s270
        %s272 = sand.u32 %s141, 1
        %s273 = smul.addr %s272, 8
        %s274 = scalar_lea.vmem [#allocation8], %s273
        %v275 = vld [vmem:[%s237] sm:$0xff]
        %v276 = vld [vmem:[#allocation5] sm:$0xff]
        %v277 = vld [vmem:[#allocation5 + $0x8] sm:$0xff]
        %v278 = vld [vmem:[#allocation5 + $0x10] sm:$0xff]
        %v279 = vld [vmem:[#allocation5 + $0x18] sm:$0xff]
        %v280 = vld [vmem:[%s2] sm:$0x1]
        %v282 = vperm.slane %v280, 0
        %vm284 = vcmask 261120
        %v286 = vsel %vm284, %v275, 0
        %288 = vmatpush.msra.mxu0 0.0
        %289 = vmatpush.msra.mxu0 0.0
        %290 = vmatpush.msra.mxu0 0.0
        %291 = vmatpush.msra.mxu0 0.0
        %292 = vmatpush.msra.mxu0 0.0
        %293 = vmatpush.msra.mxu0 0.0
        %294 = vmatpush.msra.mxu0 0.0
        %295 = vmatpush.msra.mxu0 0.0
        %296 = vmatpush.msra.mxu0 0.0
        %297 = vmatpush.msra.mxu0 0.0
        %298 = vmatpush.msra.mxu0 0.0
        %299 = vmatpush.msra.mxu0 0.0
        %300 = vmatpush.msra.mxu0 %v279
        %301 = vmatpush.msra.mxu0 %v278
        %302 = vmatpush.msra.mxu0 %v277
        %303 = vmatpush.msra.mxu0 %v276
        %304 = vmatmul.f32.gmra.mxu0 %v286
        %v305 = vpop.f32.mrf.mxu0
        %v306 = vadd.f32 %v282, %v305
        %307 = vdwg.mxu0
        %309 = vrot.lane.b32.xlu0 %v306, 120
        %v310 = vpop.permute.xlu0 %309
        %311 = vrot.lane.b32.xlu0 %v306, 112
        %v312 = vpop.permute.xlu0 %311
        %313 = vrot.lane.b32.xlu0 %v306, 104
        %v314 = vpop.permute.xlu0 %313
        %315 = vrot.lane.b32.xlu0 %v306, 96
        %v316 = vpop.permute.xlu0 %315
        %317 = vrot.lane.b32.xlu0 %v310, 96
        %v318 = vpop.permute.xlu0 %317
        %319 = vrot.lane.b32.xlu0 %v312, 96
        %v320 = vpop.permute.xlu0 %319
        %321 = vrot.lane.b32.xlu0 %v314, 96
        %v322 = vpop.permute.xlu0 %321
        %327 = vxpose.xlu0.b32.start [1/16] %v316, 128
        %328 = vxpose.xlu0.b32.cont [2/16] 0.0, 128
        %329 = vxpose.xlu0.b32.cont [3/16] 0.0, 128
        %330 = vxpose.xlu0.b32.cont [4/16] 0.0, 128
        %331 = vxpose.xlu0.b32.cont [5/16] 0.0, 128
        %332 = vxpose.xlu0.b32.cont [6/16] 0.0, 128
        %333 = vxpose.xlu0.b32.cont [7/16] 0.0, 128
        %334 = vxpose.xlu0.b32.cont [8/16] 0.0, 128
        %335 = vxpose.xlu0.b32.cont [9/16] 0.0, 128
        %336 = vxpose.xlu0.b32.cont [10/16] 0.0, 128
        %337 = vxpose.xlu0.b32.cont [11/16] 0.0, 128
        %338 = vxpose.xlu0.b32.cont [12/16] 0.0, 128
        %339 = vxpose.xlu0.b32.cont [13/16] 0.0, 128
        %340 = vxpose.xlu0.b32.cont [14/16] 0.0, 128
        %341 = vxpose.xlu0.b32.cont [15/16] 0.0, 128
        %342 = vxpose.xlu0.b32.end [16/16] 0.0, 128
        %v343 = vpop.trf.xlu0
        %v344 = vpop.trf.xlu0
        %v345 = vpop.trf.xlu0
        %v346 = vpop.trf.xlu0
        %v347 = vpop.trf.xlu0
        %v348 = vpop.trf.xlu0
        %v349 = vpop.trf.xlu0
        %v350 = vpop.trf.xlu0
        %v351 = vpop.trf.xlu0
        %v352 = vpop.trf.xlu0
        %v353 = vpop.trf.xlu0
        %v354 = vpop.trf.xlu0
        %v355 = vpop.trf.xlu0
        %v356 = vpop.trf.xlu0
        %v357 = vpop.trf.xlu0
        %v358 = vpop.trf.xlu0
        %359 = vxpose.xlu0.b32.start [1/16] %v318, 128
        %360 = vxpose.xlu0.b32.cont [2/16] 0.0, 128
        %361 = vxpose.xlu0.b32.cont [3/16] 0.0, 128
        %362 = vxpose.xlu0.b32.cont [4/16] 0.0, 128
        %363 = vxpose.xlu0.b32.cont [5/16] 0.0, 128
        %364 = vxpose.xlu0.b32.cont [6/16] 0.0, 128
        %365 = vxpose.xlu0.b32.cont [7/16] 0.0, 128
        %366 = vxpose.xlu0.b32.cont [8/16] 0.0, 128
        %367 = vxpose.xlu0.b32.cont [9/16] 0.0, 128
        %368 = vxpose.xlu0.b32.cont [10/16] 0.0, 128
        %369 = vxpose.xlu0.b32.cont [11/16] 0.0, 128
        %370 = vxpose.xlu0.b32.cont [12/16] 0.0, 128
        %371 = vxpose.xlu0.b32.cont [13/16] 0.0, 128
        %372 = vxpose.xlu0.b32.cont [14/16] 0.0, 128
        %373 = vxpose.xlu0.b32.cont [15/16] 0.0, 128
        %374 = vxpose.xlu0.b32.end [16/16] 0.0, 128
        %v375 = vpop.trf.xlu0
        %v376 = vpop.trf.xlu0
        %v377 = vpop.trf.xlu0
        %v378 = vpop.trf.xlu0
        %v379 = vpop.trf.xlu0
        %v380 = vpop.trf.xlu0
        %v381 = vpop.trf.xlu0
        %v382 = vpop.trf.xlu0
        %v383 = vpop.trf.xlu0
        %v384 = vpop.trf.xlu0
        %v385 = vpop.trf.xlu0
        %v386 = vpop.trf.xlu0
        %v387 = vpop.trf.xlu0
        %v388 = vpop.trf.xlu0
        %v389 = vpop.trf.xlu0
        %v390 = vpop.trf.xlu0
        %391 = vxpose.xlu0.b32.start [1/16] %v320, 128
        %392 = vxpose.xlu0.b32.cont [2/16] 0.0, 128
        %393 = vxpose.xlu0.b32.cont [3/16] 0.0, 128
        %394 = vxpose.xlu0.b32.cont [4/16] 0.0, 128
        %395 = vxpose.xlu0.b32.cont [5/16] 0.0, 128
        %396 = vxpose.xlu0.b32.cont [6/16] 0.0, 128
        %397 = vxpose.xlu0.b32.cont [7/16] 0.0, 128
        %398 = vxpose.xlu0.b32.cont [8/16] 0.0, 128
        %399 = vxpose.xlu0.b32.cont [9/16] 0.0, 128
        %400 = vxpose.xlu0.b32.cont [10/16] 0.0, 128
        %401 = vxpose.xlu0.b32.cont [11/16] 0.0, 128
        %402 = vxpose.xlu0.b32.cont [12/16] 0.0, 128
        %403 = vxpose.xlu0.b32.cont [13/16] 0.0, 128
        %404 = vxpose.xlu0.b32.cont [14/16] 0.0, 128
        %405 = vxpose.xlu0.b32.cont [15/16] 0.0, 128
        %406 = vxpose.xlu0.b32.end [16/16] 0.0, 128
        %v407 = vpop.trf.xlu0
        %v408 = vpop.trf.xlu0
        %v409 = vpop.trf.xlu0
        %v410 = vpop.trf.xlu0
        %v411 = vpop.trf.xlu0
        %v412 = vpop.trf.xlu0
        %v413 = vpop.trf.xlu0
        %v414 = vpop.trf.xlu0
        %v415 = vpop.trf.xlu0
        %v416 = vpop.trf.xlu0
        %v417 = vpop.trf.xlu0
        %v418 = vpop.trf.xlu0
        %v419 = vpop.trf.xlu0
        %v420 = vpop.trf.xlu0
        %v421 = vpop.trf.xlu0
        %v422 = vpop.trf.xlu0
        %423 = vxpose.xlu0.b32.start [1/16] %v322, 128
        %424 = vxpose.xlu0.b32.cont [2/16] 0.0, 128
        %425 = vxpose.xlu0.b32.cont [3/16] 0.0, 128
        %426 = vxpose.xlu0.b32.cont [4/16] 0.0, 128
        %427 = vxpose.xlu0.b32.cont [5/16] 0.0, 128
        %428 = vxpose.xlu0.b32.cont [6/16] 0.0, 128
        %429 = vxpose.xlu0.b32.cont [7/16] 0.0, 128
        %430 = vxpose.xlu0.b32.cont [8/16] 0.0, 128
        %431 = vxpose.xlu0.b32.cont [9/16] 0.0, 128
        %432 = vxpose.xlu0.b32.cont [10/16] 0.0, 128
        %433 = vxpose.xlu0.b32.cont [11/16] 0.0, 128
        %434 = vxpose.xlu0.b32.cont [12/16] 0.0, 128
        %435 = vxpose.xlu0.b32.cont [13/16] 0.0, 128
        %436 = vxpose.xlu0.b32.cont [14/16] 0.0, 128
        %437 = vxpose.xlu0.b32.cont [15/16] 0.0, 128
        %438 = vxpose.xlu0.b32.end [16/16] 0.0, 128
        %v439 = vpop.trf.xlu0
        %v440 = vpop.trf.xlu0
        %v441 = vpop.trf.xlu0
        %v442 = vpop.trf.xlu0
        %v443 = vpop.trf.xlu0
        %v444 = vpop.trf.xlu0
        %v445 = vpop.trf.xlu0
        %v446 = vpop.trf.xlu0
        %v447 = vpop.trf.xlu0
        %v448 = vpop.trf.xlu0
        %v449 = vpop.trf.xlu0
        %v450 = vpop.trf.xlu0
        %v451 = vpop.trf.xlu0
        %v452 = vpop.trf.xlu0
        %v453 = vpop.trf.xlu0
        %v454 = vpop.trf.xlu0
        %vm455 = vcmask 64512
        %v456 = vsel %vm455, %v306, 0
        %458 = vmatpush.msra.mxu0 0.0
        %459 = vmatpush.msra.mxu0 0.0
        %460 = vmatpush.msra.mxu0 0.0
        %461 = vmatpush.msra.mxu0 0.0
        %462 = vmatpush.msra.mxu0 0.0
        %463 = vmatpush.msra.mxu0 0.0
        %464 = vmatpush.msra.mxu0 0.0
        %465 = vmatpush.msra.mxu0 0.0
        %466 = vmatpush.msra.mxu0 0.0
        %467 = vmatpush.msra.mxu0 0.0
        %468 = vmatpush.msra.mxu0 0.0
        %469 = vmatpush.msra.mxu0 0.0
        %470 = vmatpush.msra.mxu0 0.0
        %471 = vmatpush.msra.mxu0 0.0
        %472 = vmatpush.msra.mxu0 0.0
        %473 = vmatpush.msra.mxu0 %v343
        %474 = vmatmul.f32.gmra.mxu0 %v456
        %v475 = vpop.f32.mrf.mxu0
        %v476 = vadd.f32 0.0, %v475
        %477 = vdwg.mxu0
        %v478 = vsel %vm455, %v310, 0
        %480 = vmatpush.msra.mxu0 0.0
        %481 = vmatpush.msra.mxu0 0.0
        %482 = vmatpush.msra.mxu0 0.0
        %483 = vmatpush.msra.mxu0 0.0
        %484 = vmatpush.msra.mxu0 0.0
        %485 = vmatpush.msra.mxu0 0.0
        %486 = vmatpush.msra.mxu0 0.0
        %487 = vmatpush.msra.mxu0 0.0
        %488 = vmatpush.msra.mxu0 0.0
        %489 = vmatpush.msra.mxu0 0.0
        %490 = vmatpush.msra.mxu0 0.0
        %491 = vmatpush.msra.mxu0 0.0
        %492 = vmatpush.msra.mxu0 0.0
        %493 = vmatpush.msra.mxu0 0.0
        %494 = vmatpush.msra.mxu0 0.0
        %495 = vmatpush.msra.mxu0 %v375
        %496 = vmatmul.f32.gmra.mxu0 %v478
        %v497 = vpop.f32.mrf.mxu0
        %v498 = vadd.f32 0.0, %v497
        %499 = vdwg.mxu0
        %v500 = vsel %vm455, %v312, 0
        %502 = vmatpush.msra.mxu0 0.0
        %503 = vmatpush.msra.mxu0 0.0
        %504 = vmatpush.msra.mxu0 0.0
        %505 = vmatpush.msra.mxu0 0.0
        %506 = vmatpush.msra.mxu0 0.0
        %507 = vmatpush.msra.mxu0 0.0
        %508 = vmatpush.msra.mxu0 0.0
        %509 = vmatpush.msra.mxu0 0.0
        %510 = vmatpush.msra.mxu0 0.0
        %511 = vmatpush.msra.mxu0 0.0
        %512 = vmatpush.msra.mxu0 0.0
        %513 = vmatpush.msra.mxu0 0.0
        %514 = vmatpush.msra.mxu0 0.0
        %515 = vmatpush.msra.mxu0 0.0
        %516 = vmatpush.msra.mxu0 0.0
        %517 = vmatpush.msra.mxu0 %v407
        %518 = vmatmul.f32.gmra.mxu0 %v500
        %v519 = vpop.f32.mrf.mxu0
        %v520 = vadd.f32 0.0, %v519
        %521 = vdwg.mxu0
        %v522 = vsel %vm455, %v314, 0
        %524 = vmatpush.msra.mxu0 0.0
        %525 = vmatpush.msra.mxu0 0.0
        %526 = vmatpush.msra.mxu0 0.0
        %527 = vmatpush.msra.mxu0 0.0
        %528 = vmatpush.msra.mxu0 0.0
        %529 = vmatpush.msra.mxu0 0.0
        %530 = vmatpush.msra.mxu0 0.0
        %531 = vmatpush.msra.mxu0 0.0
        %532 = vmatpush.msra.mxu0 0.0
        %533 = vmatpush.msra.mxu0 0.0
        %534 = vmatpush.msra.mxu0 0.0
        %535 = vmatpush.msra.mxu0 0.0
        %536 = vmatpush.msra.mxu0 0.0
        %537 = vmatpush.msra.mxu0 0.0
        %538 = vmatpush.msra.mxu0 0.0
        %539 = vmatpush.msra.mxu0 %v439
        %540 = vmatmul.f32.gmra.mxu0 %v522
        %v541 = vpop.f32.mrf.mxu0
        %v542 = vadd.f32 0.0, %v541
        %543 = vdwg.mxu0
        %v544 = vsel %vm455, %v476, -inf
        %545 = vmax.xlane.f32.xlu0 %v544
        %v546 = vpop.xlane.xlu0 %545
        %v547 = vsel %vm455, %v498, -inf
        %548 = vmax.xlane.f32.xlu0 %v547
        %v549 = vpop.xlane.xlu0 %548
        %v550 = vsel %vm455, %v520, -inf
        %551 = vmax.xlane.f32.xlu0 %v550
        %v552 = vpop.xlane.xlu0 %551
        %v553 = vsel %vm455, %v542, -inf
        %554 = vmax.xlane.f32.xlu0 %v553
        %v555 = vpop.xlane.xlu0 %554
        %v556 = vsub.f32 %v476, %v546
        %v557 = vsub.f32 %v498, %v549
        %v558 = vsub.f32 %v520, %v552
        %v559 = vsub.f32 %v542, %v555
        %v560 = vmul.f32 %v556, 1.442695
        %v561 = vpow.pop %v560
        %v562 = vmul.f32 %v557, 1.442695
        %v563 = vpow.pop %v562
        %v564 = vmul.f32 %v558, 1.442695
        %v565 = vpow.pop %v564
        %v566 = vmul.f32 %v559, 1.442695
        %v567 = vpow.pop %v566
        %v568 = vsel %vm455, %v561, 0.0
        %569 = vadd.xlane.f32.xlu0 %v568
        %v570 = vpop.xlane.xlu0 %569
        %v571 = vsel %vm455, %v563, 0.0
        %572 = vadd.xlane.f32.xlu0 %v571
        %v573 = vpop.xlane.xlu0 %572
        %v574 = vsel %vm455, %v565, 0.0
        %575 = vadd.xlane.f32.xlu0 %v574
        %v576 = vpop.xlane.xlu0 %575
        %v577 = vsel %vm455, %v567, 0.0
        %578 = vadd.xlane.f32.xlu0 %v577
        %v579 = vpop.xlane.xlu0 %578
        %v580 = vrcp.pop %v570
        %v581 = vrcp.pop %v573
        %v582 = vrcp.pop %v576
        %v583 = vrcp.pop %v579
        %v584 = vmul.f32 %v561, %v580
        %v585 = vmul.f32 %v563, %v581
        %v586 = vmul.f32 %v565, %v582
        %v587 = vmul.f32 %v567, %v583
        %588 = vrot.lane.b32.xlu0 %v306, 64
        %v589 = vpop.permute.xlu0 %588
        %590 = vrot.lane.b32.xlu0 %v310, 64
        %v591 = vpop.permute.xlu0 %590
        %592 = vrot.lane.b32.xlu0 %v312, 64
        %v593 = vpop.permute.xlu0 %592
        %594 = vrot.lane.b32.xlu0 %v314, 64
        %v595 = vpop.permute.xlu0 %594
        %600 = vxpose.xlu0.b32.start [1/16] %v589, 128
        %601 = vxpose.xlu0.b32.cont [2/16] 0.0, 128
        %602 = vxpose.xlu0.b32.cont [3/16] 0.0, 128
        %603 = vxpose.xlu0.b32.cont [4/16] 0.0, 128
        %604 = vxpose.xlu0.b32.cont [5/16] 0.0, 128
        %605 = vxpose.xlu0.b32.cont [6/16] 0.0, 128
        %606 = vxpose.xlu0.b32.cont [7/16] 0.0, 128
        %607 = vxpose.xlu0.b32.cont [8/16] 0.0, 128
        %608 = vxpose.xlu0.b32.cont [9/16] 0.0, 128
        %609 = vxpose.xlu0.b32.cont [10/16] 0.0, 128
        %610 = vxpose.xlu0.b32.cont [11/16] 0.0, 128
        %611 = vxpose.xlu0.b32.cont [12/16] 0.0, 128
        %612 = vxpose.xlu0.b32.cont [13/16] 0.0, 128
        %613 = vxpose.xlu0.b32.cont [14/16] 0.0, 128
        %614 = vxpose.xlu0.b32.cont [15/16] 0.0, 128
        %615 = vxpose.xlu0.b32.end [16/16] 0.0, 128
        %v616 = vpop.trf.xlu0
        %v617 = vpop.trf.xlu0
        %v618 = vpop.trf.xlu0
        %v619 = vpop.trf.xlu0
        %v620 = vpop.trf.xlu0
        %v621 = vpop.trf.xlu0
        %v622 = vpop.trf.xlu0
        %v623 = vpop.trf.xlu0
        %v624 = vpop.trf.xlu0
        %v625 = vpop.trf.xlu0
        %v626 = vpop.trf.xlu0
        %v627 = vpop.trf.xlu0
        %v628 = vpop.trf.xlu0
        %v629 = vpop.trf.xlu0
        %v630 = vpop.trf.xlu0
        %v631 = vpop.trf.xlu0
        %632 = vxpose.xlu0.b32.start [1/16] %v591, 128
        %633 = vxpose.xlu0.b32.cont [2/16] 0.0, 128
        %634 = vxpose.xlu0.b32.cont [3/16] 0.0, 128
        %635 = vxpose.xlu0.b32.cont [4/16] 0.0, 128
        %636 = vxpose.xlu0.b32.cont [5/16] 0.0, 128
        %637 = vxpose.xlu0.b32.cont [6/16] 0.0, 128
        %638 = vxpose.xlu0.b32.cont [7/16] 0.0, 128
        %639 = vxpose.xlu0.b32.cont [8/16] 0.0, 128
        %640 = vxpose.xlu0.b32.cont [9/16] 0.0, 128
        %641 = vxpose.xlu0.b32.cont [10/16] 0.0, 128
        %642 = vxpose.xlu0.b32.cont [11/16] 0.0, 128
        %643 = vxpose.xlu0.b32.cont [12/16] 0.0, 128
        %644 = vxpose.xlu0.b32.cont [13/16] 0.0, 128
        %645 = vxpose.xlu0.b32.cont [14/16] 0.0, 128
        %646 = vxpose.xlu0.b32.cont [15/16] 0.0, 128
        %647 = vxpose.xlu0.b32.end [16/16] 0.0, 128
        %v648 = vpop.trf.xlu0
        %v649 = vpop.trf.xlu0
        %v650 = vpop.trf.xlu0
        %v651 = vpop.trf.xlu0
        %v652 = vpop.trf.xlu0
        %v653 = vpop.trf.xlu0
        %v654 = vpop.trf.xlu0
        %v655 = vpop.trf.xlu0
        %v656 = vpop.trf.xlu0
        %v657 = vpop.trf.xlu0
        %v658 = vpop.trf.xlu0
        %v659 = vpop.trf.xlu0
        %v660 = vpop.trf.xlu0
        %v661 = vpop.trf.xlu0
        %v662 = vpop.trf.xlu0
        %v663 = vpop.trf.xlu0
        %664 = vxpose.xlu0.b32.start [1/16] %v593, 128
        %665 = vxpose.xlu0.b32.cont [2/16] 0.0, 128
        %666 = vxpose.xlu0.b32.cont [3/16] 0.0, 128
        %667 = vxpose.xlu0.b32.cont [4/16] 0.0, 128
        %668 = vxpose.xlu0.b32.cont [5/16] 0.0, 128
        %669 = vxpose.xlu0.b32.cont [6/16] 0.0, 128
        %670 = vxpose.xlu0.b32.cont [7/16] 0.0, 128
        %671 = vxpose.xlu0.b32.cont [8/16] 0.0, 128
        %672 = vxpose.xlu0.b32.cont [9/16] 0.0, 128
        %673 = vxpose.xlu0.b32.cont [10/16] 0.0, 128
        %674 = vxpose.xlu0.b32.cont [11/16] 0.0, 128
        %675 = vxpose.xlu0.b32.cont [12/16] 0.0, 128
        %676 = vxpose.xlu0.b32.cont [13/16] 0.0, 128
        %677 = vxpose.xlu0.b32.cont [14/16] 0.0, 128
        %678 = vxpose.xlu0.b32.cont [15/16] 0.0, 128
        %679 = vxpose.xlu0.b32.end [16/16] 0.0, 128
        %v680 = vpop.trf.xlu0
        %v681 = vpop.trf.xlu0
        %v682 = vpop.trf.xlu0
        %v683 = vpop.trf.xlu0
        %v684 = vpop.trf.xlu0
        %v685 = vpop.trf.xlu0
        %v686 = vpop.trf.xlu0
        %v687 = vpop.trf.xlu0
        %v688 = vpop.trf.xlu0
        %v689 = vpop.trf.xlu0
        %v690 = vpop.trf.xlu0
        %v691 = vpop.trf.xlu0
        %v692 = vpop.trf.xlu0
        %v693 = vpop.trf.xlu0
        %v694 = vpop.trf.xlu0
        %v695 = vpop.trf.xlu0
        %696 = vxpose.xlu0.b32.start [1/16] %v595, 128
        %697 = vxpose.xlu0.b32.cont [2/16] 0.0, 128
        %698 = vxpose.xlu0.b32.cont [3/16] 0.0, 128
        %699 = vxpose.xlu0.b32.cont [4/16] 0.0, 128
        %700 = vxpose.xlu0.b32.cont [5/16] 0.0, 128
        %701 = vxpose.xlu0.b32.cont [6/16] 0.0, 128
        %702 = vxpose.xlu0.b32.cont [7/16] 0.0, 128
        %703 = vxpose.xlu0.b32.cont [8/16] 0.0, 128
        %704 = vxpose.xlu0.b32.cont [9/16] 0.0, 128
        %705 = vxpose.xlu0.b32.cont [10/16] 0.0, 128
        %706 = vxpose.xlu0.b32.cont [11/16] 0.0, 128
        %707 = vxpose.xlu0.b32.cont [12/16] 0.0, 128
        %708 = vxpose.xlu0.b32.cont [13/16] 0.0, 128
        %709 = vxpose.xlu0.b32.cont [14/16] 0.0, 128
        %710 = vxpose.xlu0.b32.cont [15/16] 0.0, 128
        %711 = vxpose.xlu0.b32.end [16/16] 0.0, 128
        %v712 = vpop.trf.xlu0
        %v713 = vpop.trf.xlu0
        %v714 = vpop.trf.xlu0
        %v715 = vpop.trf.xlu0
        %v716 = vpop.trf.xlu0
        %v717 = vpop.trf.xlu0
        %v718 = vpop.trf.xlu0
        %v719 = vpop.trf.xlu0
        %v720 = vpop.trf.xlu0
        %v721 = vpop.trf.xlu0
        %v722 = vpop.trf.xlu0
        %v723 = vpop.trf.xlu0
        %v724 = vpop.trf.xlu0
        %v725 = vpop.trf.xlu0
        %v726 = vpop.trf.xlu0
        %v727 = vpop.trf.xlu0
        %v729 = vsel %vm455, %v616, 0
        %v732 = vsel %vm455, %v584, 0
        %734 = vmatpush.xpose.msra.mxu0 0.0
        %735 = vmatpush.xpose.msra.mxu0 0.0
        %736 = vmatpush.xpose.msra.mxu0 0.0
        %737 = vmatpush.xpose.msra.mxu0 0.0
        %738 = vmatpush.xpose.msra.mxu0 0.0
        %739 = vmatpush.xpose.msra.mxu0 0.0
        %740 = vmatpush.xpose.msra.mxu0 0.0
        %741 = vmatpush.xpose.msra.mxu0 0.0
        %742 = vmatpush.xpose.msra.mxu0 0.0
        %743 = vmatpush.xpose.msra.mxu0 0.0
        %744 = vmatpush.xpose.msra.mxu0 0.0
        %745 = vmatpush.xpose.msra.mxu0 0.0
        %746 = vmatpush.xpose.msra.mxu0 0.0
        %747 = vmatpush.xpose.msra.mxu0 0.0
        %748 = vmatpush.xpose.msra.mxu0 0.0
        %749 = vmatpush.xpose.msra.mxu0 %v732
        %750 = vmatmul.f32.gmra.mxu0 %v729
        %v751 = vpop.f32.mrf.mxu0
        %v752 = vadd.f32 0.0, %v751
        %753 = vdwg.mxu0
        %v755 = vsel %vm455, %v648, 0
        %v758 = vsel %vm455, %v585, 0
        %760 = vmatpush.xpose.msra.mxu0 0.0
        %761 = vmatpush.xpose.msra.mxu0 0.0
        %762 = vmatpush.xpose.msra.mxu0 0.0
        %763 = vmatpush.xpose.msra.mxu0 0.0
        %764 = vmatpush.xpose.msra.mxu0 0.0
        %765 = vmatpush.xpose.msra.mxu0 0.0
        %766 = vmatpush.xpose.msra.mxu0 0.0
        %767 = vmatpush.xpose.msra.mxu0 0.0
        %768 = vmatpush.xpose.msra.mxu0 0.0
        %769 = vmatpush.xpose.msra.mxu0 0.0
        %770 = vmatpush.xpose.msra.mxu0 0.0
        %771 = vmatpush.xpose.msra.mxu0 0.0
        %772 = vmatpush.xpose.msra.mxu0 0.0
        %773 = vmatpush.xpose.msra.mxu0 0.0
        %774 = vmatpush.xpose.msra.mxu0 0.0
        %775 = vmatpush.xpose.msra.mxu0 %v758
        %776 = vmatmul.f32.gmra.mxu0 %v755
        %v777 = vpop.f32.mrf.mxu0
        %v778 = vadd.f32 0.0, %v777
        %779 = vdwg.mxu0
        %v781 = vsel %vm455, %v680, 0
        %v784 = vsel %vm455, %v586, 0
        %786 = vmatpush.xpose.msra.mxu0 0.0
        %787 = vmatpush.xpose.msra.mxu0 0.0
        %788 = vmatpush.xpose.msra.mxu0 0.0
        %789 = vmatpush.xpose.msra.mxu0 0.0
        %790 = vmatpush.xpose.msra.mxu0 0.0
        %791 = vmatpush.xpose.msra.mxu0 0.0
        %792 = vmatpush.xpose.msra.mxu0 0.0
        %793 = vmatpush.xpose.msra.mxu0 0.0
        %794 = vmatpush.xpose.msra.mxu0 0.0
        %795 = vmatpush.xpose.msra.mxu0 0.0
        %796 = vmatpush.xpose.msra.mxu0 0.0
        %797 = vmatpush.xpose.msra.mxu0 0.0
        %798 = vmatpush.xpose.msra.mxu0 0.0
        %799 = vmatpush.xpose.msra.mxu0 0.0
        %800 = vmatpush.xpose.msra.mxu0 0.0
        %801 = vmatpush.xpose.msra.mxu0 %v784
        %802 = vmatmul.f32.gmra.mxu0 %v781
        %v803 = vpop.f32.mrf.mxu0
        %v804 = vadd.f32 0.0, %v803
        %805 = vdwg.mxu0
        %v807 = vsel %vm455, %v712, 0
        %v810 = vsel %vm455, %v587, 0
        %812 = vmatpush.xpose.msra.mxu0 0.0
        %813 = vmatpush.xpose.msra.mxu0 0.0
        %814 = vmatpush.xpose.msra.mxu0 0.0
        %815 = vmatpush.xpose.msra.mxu0 0.0
        %816 = vmatpush.xpose.msra.mxu0 0.0
        %817 = vmatpush.xpose.msra.mxu0 0.0
        %818 = vmatpush.xpose.msra.mxu0 0.0
        %819 = vmatpush.xpose.msra.mxu0 0.0
        %820 = vmatpush.xpose.msra.mxu0 0.0
        %821 = vmatpush.xpose.msra.mxu0 0.0
        %822 = vmatpush.xpose.msra.mxu0 0.0
        %823 = vmatpush.xpose.msra.mxu0 0.0
        %824 = vmatpush.xpose.msra.mxu0 0.0
        %825 = vmatpush.xpose.msra.mxu0 0.0
        %826 = vmatpush.xpose.msra.mxu0 0.0
        %827 = vmatpush.xpose.msra.mxu0 %v810
        %828 = vmatmul.f32.gmra.mxu0 %v807
        %v829 = vpop.f32.mrf.mxu0
        %v830 = vadd.f32 0.0, %v829
        %831 = vdwg.mxu0
        %832 = vxpose.xlu0.b32.start [1/16] %v752, 128
        %833 = vxpose.xlu0.b32.cont [2/16] 0.0, 128
        %834 = vxpose.xlu0.b32.cont [3/16] 0.0, 128
        %835 = vxpose.xlu0.b32.cont [4/16] 0.0, 128
        %836 = vxpose.xlu0.b32.cont [5/16] 0.0, 128
        %837 = vxpose.xlu0.b32.cont [6/16] 0.0, 128
        %838 = vxpose.xlu0.b32.cont [7/16] 0.0, 128
        %839 = vxpose.xlu0.b32.cont [8/16] 0.0, 128
        %840 = vxpose.xlu0.b32.cont [9/16] 0.0, 128
        %841 = vxpose.xlu0.b32.cont [10/16] 0.0, 128
        %842 = vxpose.xlu0.b32.cont [11/16] 0.0, 128
        %843 = vxpose.xlu0.b32.cont [12/16] 0.0, 128
        %844 = vxpose.xlu0.b32.cont [13/16] 0.0, 128
        %845 = vxpose.xlu0.b32.cont [14/16] 0.0, 128
        %846 = vxpose.xlu0.b32.cont [15/16] 0.0, 128
        %847 = vxpose.xlu0.b32.end [16/16] 0.0, 128
        %v848 = vpop.trf.xlu0
        %v849 = vpop.trf.xlu0
        %v850 = vpop.trf.xlu0
        %v851 = vpop.trf.xlu0
        %v852 = vpop.trf.xlu0
        %v853 = vpop.trf.xlu0
        %v854 = vpop.trf.xlu0
        %v855 = vpop.trf.xlu0
        %v856 = vpop.trf.xlu0
        %v857 = vpop.trf.xlu0
        %v858 = vpop.trf.xlu0
        %v859 = vpop.trf.xlu0
        %v860 = vpop.trf.xlu0
        %v861 = vpop.trf.xlu0
        %v862 = vpop.trf.xlu0
        %v863 = vpop.trf.xlu0
        %864 = vxpose.xlu0.b32.start [1/16] %v778, 128
        %865 = vxpose.xlu0.b32.cont [2/16] 0.0, 128
        %866 = vxpose.xlu0.b32.cont [3/16] 0.0, 128
        %867 = vxpose.xlu0.b32.cont [4/16] 0.0, 128
        %868 = vxpose.xlu0.b32.cont [5/16] 0.0, 128
        %869 = vxpose.xlu0.b32.cont [6/16] 0.0, 128
        %870 = vxpose.xlu0.b32.cont [7/16] 0.0, 128
        %871 = vxpose.xlu0.b32.cont [8/16] 0.0, 128
        %872 = vxpose.xlu0.b32.cont [9/16] 0.0, 128
        %873 = vxpose.xlu0.b32.cont [10/16] 0.0, 128
        %874 = vxpose.xlu0.b32.cont [11/16] 0.0, 128
        %875 = vxpose.xlu0.b32.cont [12/16] 0.0, 128
        %876 = vxpose.xlu0.b32.cont [13/16] 0.0, 128
        %877 = vxpose.xlu0.b32.cont [14/16] 0.0, 128
        %878 = vxpose.xlu0.b32.cont [15/16] 0.0, 128
        %879 = vxpose.xlu0.b32.end [16/16] 0.0, 128
        %v880 = vpop.trf.xlu0
        %v881 = vpop.trf.xlu0
        %v882 = vpop.trf.xlu0
        %v883 = vpop.trf.xlu0
        %v884 = vpop.trf.xlu0
        %v885 = vpop.trf.xlu0
        %v886 = vpop.trf.xlu0
        %v887 = vpop.trf.xlu0
        %v888 = vpop.trf.xlu0
        %v889 = vpop.trf.xlu0
        %v890 = vpop.trf.xlu0
        %v891 = vpop.trf.xlu0
        %v892 = vpop.trf.xlu0
        %v893 = vpop.trf.xlu0
        %v894 = vpop.trf.xlu0
        %v895 = vpop.trf.xlu0
        %896 = vxpose.xlu0.b32.start [1/16] %v804, 128
        %897 = vxpose.xlu0.b32.cont [2/16] 0.0, 128
        %898 = vxpose.xlu0.b32.cont [3/16] 0.0, 128
        %899 = vxpose.xlu0.b32.cont [4/16] 0.0, 128
        %900 = vxpose.xlu0.b32.cont [5/16] 0.0, 128
        %901 = vxpose.xlu0.b32.cont [6/16] 0.0, 128
        %902 = vxpose.xlu0.b32.cont [7/16] 0.0, 128
        %903 = vxpose.xlu0.b32.cont [8/16] 0.0, 128
        %904 = vxpose.xlu0.b32.cont [9/16] 0.0, 128
        %905 = vxpose.xlu0.b32.cont [10/16] 0.0, 128
        %906 = vxpose.xlu0.b32.cont [11/16] 0.0, 128
        %907 = vxpose.xlu0.b32.cont [12/16] 0.0, 128
        %908 = vxpose.xlu0.b32.cont [13/16] 0.0, 128
        %909 = vxpose.xlu0.b32.cont [14/16] 0.0, 128
        %910 = vxpose.xlu0.b32.cont [15/16] 0.0, 128
        %911 = vxpose.xlu0.b32.end [16/16] 0.0, 128
        %v912 = vpop.trf.xlu0
        %v913 = vpop.trf.xlu0
        %v914 = vpop.trf.xlu0
        %v915 = vpop.trf.xlu0
        %v916 = vpop.trf.xlu0
        %v917 = vpop.trf.xlu0
        %v918 = vpop.trf.xlu0
        %v919 = vpop.trf.xlu0
        %v920 = vpop.trf.xlu0
        %v921 = vpop.trf.xlu0
        %v922 = vpop.trf.xlu0
        %v923 = vpop.trf.xlu0
        %v924 = vpop.trf.xlu0
        %v925 = vpop.trf.xlu0
        %v926 = vpop.trf.xlu0
        %v927 = vpop.trf.xlu0
        %928 = vxpose.xlu0.b32.start [1/16] %v830, 128
        %929 = vxpose.xlu0.b32.cont [2/16] 0.0, 128
        %930 = vxpose.xlu0.b32.cont [3/16] 0.0, 128
        %931 = vxpose.xlu0.b32.cont [4/16] 0.0, 128
        %932 = vxpose.xlu0.b32.cont [5/16] 0.0, 128
        %933 = vxpose.xlu0.b32.cont [6/16] 0.0, 128
        %934 = vxpose.xlu0.b32.cont [7/16] 0.0, 128
        %935 = vxpose.xlu0.b32.cont [8/16] 0.0, 128
        %936 = vxpose.xlu0.b32.cont [9/16] 0.0, 128
        %937 = vxpose.xlu0.b32.cont [10/16] 0.0, 128
        %938 = vxpose.xlu0.b32.cont [11/16] 0.0, 128
        %939 = vxpose.xlu0.b32.cont [12/16] 0.0, 128
        %940 = vxpose.xlu0.b32.cont [13/16] 0.0, 128
        %941 = vxpose.xlu0.b32.cont [14/16] 0.0, 128
        %942 = vxpose.xlu0.b32.cont [15/16] 0.0, 128
        %943 = vxpose.xlu0.b32.end [16/16] 0.0, 128
        %v944 = vpop.trf.xlu0
        %v945 = vpop.trf.xlu0
        %v946 = vpop.trf.xlu0
        %v947 = vpop.trf.xlu0
        %v948 = vpop.trf.xlu0
        %v949 = vpop.trf.xlu0
        %v950 = vpop.trf.xlu0
        %v951 = vpop.trf.xlu0
        %v952 = vpop.trf.xlu0
        %v953 = vpop.trf.xlu0
        %v954 = vpop.trf.xlu0
        %v955 = vpop.trf.xlu0
        %v956 = vpop.trf.xlu0
        %v957 = vpop.trf.xlu0
        %v958 = vpop.trf.xlu0
        %v959 = vpop.trf.xlu0
        %v960 = vrot.slane %v912, 4
        %vm961 = vcmask 1047556
        %v962 = vsel %vm961, %v960, %v848
        %v963 = vrot.slane %v848, 4
        %v964 = vsel %vm961, %v912, %v963
        %v966 = vunpack.c.l.s4 1983009808
        %v967 = vunpack.c.0.s8 %v966
        %v968 = vperm.slane %v962, %v967
        %v970 = vunpack.c.l.s4 1983009808
        %v971 = vunpack.c.0.s8 %v970
        %v972 = vperm.slane %v964, %v971
        %v973 = vrot.slane %v944, 4
        %v974 = vsel %vm961, %v973, %v880
        %v975 = vrot.slane %v880, 4
        %v976 = vsel %vm961, %v944, %v975
        %v978 = vunpack.c.l.s4 1983009808
        %v979 = vunpack.c.0.s8 %v978
        %v980 = vperm.slane %v974, %v979
        %v982 = vunpack.c.l.s4 1983009808
        %v983 = vunpack.c.0.s8 %v982
        %v984 = vperm.slane %v976, %v983
        %v985 = vrot.slane %v980, 4
        %v986 = vsel %vm961, %v985, %v968
        %v987 = vrot.slane %v968, 4
        %v988 = vsel %vm961, %v980, %v987
        %v990 = vunpack.c.l.s4 1934713408
        %v991 = vunpack.c.0.s8 %v990
        %v992 = vperm.slane %v986, %v991
        %v994 = vunpack.c.l.s4 1934713408
        %v995 = vunpack.c.0.s8 %v994
        %v996 = vperm.slane %v988, %v995
        %v997 = vrot.slane %v984, 4
        %v998 = vsel %vm961, %v997, %v972
        %v999 = vrot.slane %v972, 4
        %v1000 = vsel %vm961, %v984, %v999
        %v1002 = vunpack.c.l.s4 1934713408
        %v1003 = vunpack.c.0.s8 %v1002
        %v1004 = vperm.slane %v998, %v1003
        %v1006 = vunpack.c.l.s4 1934713408
        %v1007 = vunpack.c.0.s8 %v1006
        %v1008 = vperm.slane %v1000, %v1007
        %v1009 = vrot.slane %v992, 4
        %v1010 = vsel %vm961, 0.0, %v1009
        %v1011 = vrot.slane %v996, 4
        %v1012 = vsel %vm961, 0.0, %v1011
        %v1013 = vrot.slane %v1004, 4
        %v1014 = vsel %vm961, 0.0, %v1013
        %v1015 = vrot.slane %v1008, 4
        %v1016 = vsel %vm961, 0.0, %v1015
        %v1017 = vsel %vm961, %v1011, %v992
        %v1019 = vunpack.c.l.s4 1983009808
        %v1020 = vunpack.c.0.s8 %v1019
        %v1021 = vperm.slane %v1017, %v1020
        %v1022 = vrot.slane %v1012, 4
        %v1023 = vsel %vm961, %v1022, %v1010
        %v1025 = vunpack.c.l.s4 1983009808
        %v1026 = vunpack.c.0.s8 %v1025
        %v1027 = vperm.slane %v1023, %v1026
        %v1028 = vsel %vm961, %v1015, %v1004
        %v1030 = vunpack.c.l.s4 1983009808
        %v1031 = vunpack.c.0.s8 %v1030
        %v1032 = vperm.slane %v1028, %v1031
        %v1033 = vrot.slane %v1016, 4
        %v1034 = vsel %vm961, %v1033, %v1014
        %v1036 = vunpack.c.l.s4 1983009808
        %v1037 = vunpack.c.0.s8 %v1036
        %v1038 = vperm.slane %v1034, %v1037
        %v1039 = vrot.slane %v1027, 4
        %v1040 = vsel %vm961, %v1039, %v1021
        %v1041 = vrot.slane %v1021, 4
        %v1042 = vsel %vm961, %v1027, %v1041
        %v1044 = vunpack.c.l.s4 1934713408
        %v1045 = vunpack.c.0.s8 %v1044
        %v1046 = vperm.slane %v1040, %v1045
        %v1048 = vunpack.c.l.s4 1934713408
        %v1049 = vunpack.c.0.s8 %v1048
        %v1050 = vperm.slane %v1042, %v1049
        %v1051 = vrot.slane %v1038, 4
        %v1052 = vsel %vm961, %v1051, %v1032
        %v1053 = vrot.slane %v1032, 4
        %v1054 = vsel %vm961, %v1038, %v1053
        %v1056 = vunpack.c.l.s4 1934713408
        %v1057 = vunpack.c.0.s8 %v1056
        %v1058 = vperm.slane %v1052, %v1057
        %v1060 = vunpack.c.l.s4 1934713408
        %v1061 = vunpack.c.0.s8 %v1060
        %v1062 = vperm.slane %v1054, %v1061
        %v1063 = vrot.slane %v1058, 4
        %v1064 = vsel %vm961, %v1063, %v1046
        %v1065 = vrot.slane %v1046, 4
        %v1066 = vsel %vm961, %v1058, %v1065
        %v1067 = vrot.slane %v1062, 4
        %v1068 = vsel %vm961, %v1067, %v1050
        %v1069 = vrot.slane %v1050, 4
        %v1070 = vsel %vm961, %v1062, %v1069
        %1072 = vrot.lane.b32.xlu0 %v1066, 8
        %v1073 = vpop.permute.xlu0 %1072
        %1076 = vrot.lane.b32.xlu0 %v1068, 16
        %v1077 = vpop.permute.xlu0 %1076
        %1080 = vrot.lane.b32.xlu0 %v1070, 24
        %v1081 = vpop.permute.xlu0 %1080
        %v1083 = vsel %vm455, %v1064, %v1073
        %vm1084 = vcmask 130048
        %v1085 = vsel %vm1084, %v1083, %v1077
        %vm1086 = vcmask 195584
        %v1087 = vsel %vm1086, %v1085, %v1081
        %v1088 = vld [vmem:[#allocation7] sm:$0xff]
        %v1089 = vld [vmem:[#allocation7 + $0x8] sm:$0xff]
        %v1090 = vld [vmem:[#allocation7 + $0x10] sm:$0xff]
        %v1091 = vld [vmem:[#allocation7 + $0x18] sm:$0xff]
        %v1092 = vld [vmem:[%s4] sm:$0x1]
        %v1094 = vperm.slane %v1092, 0
        %v1097 = vsel %vm284, %v1087, 0
        %1099 = vmatpush.msra.mxu0 0.0
        %1100 = vmatpush.msra.mxu0 0.0
        %1101 = vmatpush.msra.mxu0 0.0
        %1102 = vmatpush.msra.mxu0 0.0
        %1103 = vmatpush.msra.mxu0 0.0
        %1104 = vmatpush.msra.mxu0 0.0
        %1105 = vmatpush.msra.mxu0 0.0
        %1106 = vmatpush.msra.mxu0 0.0
        %1107 = vmatpush.msra.mxu0 0.0
        %1108 = vmatpush.msra.mxu0 0.0
        %1109 = vmatpush.msra.mxu0 0.0
        %1110 = vmatpush.msra.mxu0 0.0
        %1111 = vmatpush.msra.mxu0 %v1091
        %1112 = vmatpush.msra.mxu0 %v1090
        %1113 = vmatpush.msra.mxu0 %v1089
        %1114 = vmatpush.msra.mxu0 %v1088
        %1115 = vmatmul.f32.gmra.mxu0 %v1097
        %v1116 = vpop.f32.mrf.mxu0
        %v1117 = vadd.f32 %v1094, %v1116
        %1118 = vdwg.mxu0
        %1119 = vst.msk [vmem:[%s274] sm:$0xff] %vm284, %v1117
        %s1120 = sand.u32 %s141, 1
        %s1121 = scalar_lea.sflag [#allocation4], %s1120
        %s1122 = sand.u32 %s141, 1
        %s1123 = smul.addr %s1122, 8
        %s1124 = scalar_lea.vmem [#allocation8], %s1123
        // Predicated region
        $region53: #{tpu_custom_call.1} parent=39 // pred_check
          %p1125 = pneg %p151
        $region54: #{tpu_custom_call.1} parent=39 // pred_check_branch
          %1127 = sbr.rel (%p1125) target = $region56
        $region55: #{tpu_custom_call.1} parent=39 // pred_region
          %1129 = vsyncadd %s1121, 0
          %s1130 = smul.addr %s23, 8
          %s1131 = scalar_lea.hbm %s5, %s1130
          %s1133 = sshll.u32 %s1124, 4
          %s1134 = int_to_ptr.vmem [resolvable:$true] %s1133
          %s1135 = sshll.u32 %s1131, 4
          %s1136 = int_to_ptr.hbm [resolvable:$true] %s1135
          %1138 = dma.vmem_to_hbm [thread:$0]  %s1134, 128, %s1136, %s1121
        $region56: #{tpu_custom_call.1} parent=39 // pred_fallthru
          _
      $region40: #{tpu_custom_call.1} parent=5 // pred_fallthru
        _
      %p1139 = scmp.le.s32.totalorder 2, %s18
      // Predicated region
      $region57: #{tpu_custom_call.1} parent=5 // pred_check
        %p1140 = pneg %p1139
      $region58: #{tpu_custom_call.1} parent=5 // pred_check_branch
        %1142 = sbr.rel (%p1140) target = $region60
      $region59: #{tpu_custom_call.1} parent=5 // pred_region
        %s1143 = ssub.s32 %s18, 2
        // Predicated region
        $region61: #{tpu_custom_call.1} parent=59 // pred_check
          %p1144 = pneg %p157
        $region62: #{tpu_custom_call.1} parent=59 // pred_check_branch
          %1146 = sbr.rel (%p1144) target = $region64
        $region63: #{tpu_custom_call.1} parent=59 // pred_region
          %s1147 = sand.u32 %s142, 1
          %s1148 = scalar_lea.sflag [#allocation4], %s1147
          %s1149 = sand.u32 %s142, 1
          %s1150 = smul.addr %s1149, 8
          %s1151 = scalar_lea.vmem [#allocation8], %s1150
          %1153 = dma.done %s1148, 128
        $region64: #{tpu_custom_call.1} parent=59 // pred_fallthru
          _
      $region60: #{tpu_custom_call.1} parent=5 // pred_fallthru
        _
    $region6: #{tpu_custom_call.1} parent=1 // loop_footer
      %s22 = sadd.s32 1, %s18
    $region7: #{tpu_custom_call.1} parent=1 // loop_footer_branch
      %17 = sbr.rel target = $region3
    $region8: #{tpu_custom_call.1} parent=1 // loop_exit
      _
    %1154 = vsyncpa [#allocation3], 1
    %s1155 = scalar_lea.sflag [#allocation3], 1
    %1156 = vsyncpa %s1155, 1
    %1157 = vsyncpa [#allocation6], 1
    %1158 = vsyncpa [#allocation4], 1
    %s1159 = scalar_lea.sflag [#allocation4], 1
    %1160 = vsyncpa %s1159, 1

</llo_original>
